<compile_context>
chip_gen: v5e
topology: v5e:2x2
jax: 0.10.0
libtpu: 0.0.40
codegen_flags: <defaults>
</compile_context>

<pallas_src>
import functools

import numpy as np

import jax
import jax.numpy as jnp
from jax.experimental import pallas as pl
from jax.experimental.pallas import tpu as pltpu


def _round_up(v, m):
    return (v + m - 1) // m * m


def _sigmoid(z):
    # sigmoid(z) == 0.5*tanh(0.5*z) + 0.5: one EUP op per element instead of
    # exp + full-precision divide, so the elementwise path stays DMA-bound.
    return 0.5 * jnp.tanh(0.5 * z) + 0.5


def _aea_kernel(x_ref, fx_ref, w1_ref, b1_ref, w2_ref, b2_ref, o_ref,
                *, scale_value, from_value, value_interval):
    # x_ref : (T, C)  io dtype    fx_ref: (T, K) io dtype
    # w1_ref: (C, H)  io dtype    b1_ref: (1, H) f32
    # w2_ref: (1, H)  f32         b2_ref: (1, 1) f32 in SMEM
    # o_ref : (T, K)  io dtype

    # Linear(C -> C//16) on the MXU (bf16 operands when streaming bf16), f32 acc.
    h = jnp.dot(x_ref[...], w1_ref[...], preferred_element_type=jnp.float32)
    h = h + b1_ref[...]
    h = jnp.where(h > 0, h, 0.2 * h)            # LeakyReLU(0.2) per the module spec

    # Linear(C//16 -> 1): degenerate N=1 matmul -> VPU multiply + cross-lane sum,
    # all in f32.  b2 is a scalar read from SMEM.
    psi = jnp.sum(h * w2_ref[...], axis=-1, keepdims=True) + b2_ref[0, 0]
    clamp_value = _sigmoid(psi) * value_interval + from_value          # (T, 1)

    # Big elementwise path: sigmoid result goes straight into o_ref (no extra
    # (T, K) f32 temporary kept live), then L1-normalize.  The sigmoid output is
    # positive, so |.| == identity for the p=1 norm.
    z = scale_value * (fx_ref[...].astype(jnp.float32) - clamp_value)
    o_ref[...] = _sigmoid(z).astype(o_ref.dtype)

    v = o_ref[...].astype(jnp.float32)
    # Exact reciprocal on the tiny (T, 1) denominator (off the critical path);
    # the approximate EUP rcp broke the "rows sum to 1" invariant.
    denom = jnp.maximum(jnp.sum(v, axis=-1, keepdims=True), 1e-12)
    o_ref[...] = (v * (1.0 / denom)).astype(o_ref.dtype)


def aea_forward(x, f_x, w1, b1, w2, b2,
                scale_value=50.0, from_value=0.4, value_interval=0.5,
                io_dtype=None):
    """x: (B, HW, C); f_x: (B, HW, K).
    w1: (C//16, C), b1: (C//16,), w2: (1, C//16), b2: (1,)  (PyTorch Linear layout).

    io_dtype: HBM streaming dtype for x / f_x / output.  None -> follow f_x.dtype.
    Supply bf16 activations on v6e/v7x to halve the dominant f_x/out HBM traffic
    (compute stays f32 in-kernel).  Forcing a dtype that differs from the inputs
    costs one extra conversion pass, so prefer passing bf16 directly.
    """
    B, HW, C = x.shape
    K = f_x.shape[-1]
    H = w1.shape[0]

    if io_dtype is None:
        io_dtype = f_x.dtype
    io_dtype = np.dtype(io_dtype)
    if io_dtype not in (np.dtype(jnp.bfloat16), np.dtype(jnp.float32)):
        io_dtype = np.dtype(jnp.float32)
    io_bytes = io_dtype.itemsize

    # --- parameters: PyTorch Linear stores (out, in); pre-transpose once. ------
    w1_t = jnp.asarray(w1, jnp.float32).T.astype(io_dtype)        # (C, H)
    b1_2 = jnp.asarray(b1, jnp.float32).reshape(1, H)
    w2_row = jnp.asarray(w2, jnp.float32).reshape(1, H)
    b2_2 = jnp.asarray(b2, jnp.float32).reshape(1, 1)             # -> SMEM scalar

    # --- activations: fold batch into rows; no padding, no extra HBM passes. ---
    R = B * HW
    x2 = jnp.asarray(x).astype(io_dtype).reshape(R, C)
    fx2 = jnp.asarray(f_x).astype(io_dtype).reshape(R, K)

    # --- row tile selection -----------------------------------------------------
    sub = 16 if io_bytes == 2 else 8          # second-minor granularity (bf16 packs x2)
    budget = 40 * 1024 * 1024                 # fits v7x's 64 MiB physical VMEM w/ headroom

    def vmem_estimate(t):
        blocks = 2 * (t * C + 2 * t * K) * io_bytes     # double-buffered x, f_x, out
        temps = 2 * t * K * 4                           # live f32 elementwise temporaries
        weights = 2 * (C * H * io_bytes + 3 * H * 4) + 4096
        return blocks + temps + weights

    T = sub
    for cand in (2048, 1024, 512, 256, 128, 64, 32, 16, 8):
        if cand % sub:
            continue
        if vmem_estimate(cand) <= budget:
            T = cand
            break
    # Keep >= 2 grid steps when possible so ("parallel",) can shard rows across
    # both v7x TensorCores (a 1-step grid leaves half the chip idle).
    if R >= 2 * sub:
        T = min(T, _round_up(pl.cdiv(R, 2), sub))
    T = min(T, _round_up(R, sub))
    if T >= R:
        T = R                                 # single full-extent row block (layout-legal)

    # Ragged last tile handled by Pallas: OOB rows are garbage that is never
    # written back (all math is per-row, so valid rows are unaffected).
    grid = (pl.cdiv(R, T),)

    kernel = functools.partial(
        _aea_kernel,
        scale_value=float(scale_value),
        from_value=float(from_value),
        value_interval=float(value_interval),
    )

    out2 = pl.pallas_call(
        kernel,
        out_shape=jax.ShapeDtypeStruct((R, K), io_dtype),
        grid_spec=pltpu.PrefetchScalarGridSpec(
            num_scalar_prefetch=0,
            grid=grid,
            in_specs=[
                pl.BlockSpec((T, C), lambda i: (i, 0)),             # x rows
                pl.BlockSpec((T, K), lambda i: (i, 0)),             # f_x rows (true K)
                pl.BlockSpec((C, H), lambda i: (0, 0)),             # W1^T (resident)
                pl.BlockSpec((1, H), lambda i: (0, 0)),             # b1
                pl.BlockSpec((1, H), lambda i: (0, 0)),             # w2 row
                pl.BlockSpec(memory_space=pltpu.MemorySpace.SMEM),  # b2 scalar
            ],
            out_specs=pl.BlockSpec((T, K), lambda i: (i, 0)),
        ),
        compiler_params=pltpu.CompilerParams(
            dimension_semantics=("parallel",),
            vmem_limit_bytes=48 * 1024 * 1024,
        ),
    )(x2, fx2, w1_t, b1_2, w2_row, b2_2)

    return out2.reshape(B, HW, K)             # metadata-only reshape


def aea_reference(x, f_x, w1, b1, w2, b2,
                  scale_value=50.0, from_value=0.4, value_interval=0.5):
    """Pure-JAX reference mirroring the PyTorch forward (f32 math)."""
    x = jnp.asarray(x, jnp.float32)
    f_x = jnp.asarray(f_x, jnp.float32)
    h = x @ w1.T + b1
    h = jnp.where(h > 0, h, 0.2 * h)
    psi = jax.nn.sigmoid(h @ w2.T + b2)                        # (B, HW, 1)
    clamp_value = psi * value_interval + from_value
    clamp_fx = jax.nn.sigmoid(scale_value * (f_x - clamp_value))
    denom = jnp.maximum(jnp.sum(jnp.abs(clamp_fx), axis=-1, keepdims=True), 1e-12)
    return clamp_fx / denom


if __name__ == "__main__":
    # Small but representative shapes: inplanes must be >= 16 so C//16 >= 1.
    B, HW, C = 2, 16, 64          # x: (batch, tokens, channels)
    K = HW                        # f_x: per-token attention over HW positions
    Hh = C // 16

    key = jax.random.PRNGKey(0)
    kx, kf, kw1, kb1, kw2, kb2 = jax.random.split(key, 6)

    x = jax.random.normal(kx, (B, HW, C), jnp.float32)
    f_x = jax.random.uniform(kf, (B, HW, K), jnp.float32)

    # Deterministic synthetic parameters (PyTorch nn.Linear layout: (out, in)).
    w1 = jax.random.normal(kw1, (Hh, C), jnp.float32) * (1.0 / jnp.sqrt(C))
    b1 = jax.random.normal(kb1, (Hh,), jnp.float32) * 0.01
    w2 = jax.random.normal(kw2, (1, Hh), jnp.float32) * (1.0 / jnp.sqrt(Hh))
    b2 = jax.random.normal(kb2, (1,), jnp.float32) * 0.01

    # --- f32-streaming run -----------------------------------------------------
    out = jax.block_until_ready(aea_forward(x, f_x, w1, b1, w2, b2))
    ref = aea_reference(x, f_x, w1, b1, w2, b2)
    assert out.shape == (B, HW, K)
    # Output tolerance is dominated by scale_value=50 amplifying tiny matmul
    # precision differences (kernel f32 VPU path vs XLA default MXU precision).
    assert jnp.allclose(out, ref, atol=2e-2, rtol=1e-2), "f32 run: mismatch vs reference"
    # Exact (T,1) reciprocal -> rows L1-normalize to 1 within f32 rounding.
    assert jnp.allclose(jnp.sum(out, axis=-1), 1.0, atol=1e-3), "f32 run: row sums != 1"

    # --- bf16-streaming run (recommended on v6e/v7x; f32 compute in-kernel) ----
    x_b = x.astype(jnp.bfloat16)
    f_b = f_x.astype(jnp.bfloat16)
    out_b = jax.block_until_ready(aea_forward(x_b, f_b, w1, b1, w2, b2))
    ref_b = aea_reference(x_b, f_b, w1, b1, w2, b2)   # reference on the same bf16 inputs
    assert out_b.shape == (B, HW, K) and out_b.dtype == jnp.bfloat16
    assert jnp.allclose(out_b.astype(jnp.float32), ref_b, atol=3e-2, rtol=2e-2), \
        "bf16 run: mismatch vs reference"
    assert jnp.allclose(jnp.sum(out_b.astype(jnp.float32), axis=-1), 1.0, atol=1e-2), \
        "bf16 run: row sums != 1"

    print("KERNEL_OK")
</pallas_src>

<mosaic_0001>
module attributes {stable_mosaic.version = 11 : i64} {
  func.func @_aea_kernel(%arg0: i32, %arg1: memref<16x64xf32, #tpu.memory_space<vmem>>, %arg2: memref<16x16xf32, #tpu.memory_space<vmem>>, %arg3: memref<64x4xf32, #tpu.memory_space<vmem>>, %arg4: memref<1x4xf32, #tpu.memory_space<vmem>>, %arg5: memref<1x4xf32, #tpu.memory_space<vmem>>, %arg6: memref<1x1xf32, #tpu.memory_space<smem>>, %arg7: memref<16x16xf32, #tpu.memory_space<vmem>>) attributes {dimension_semantics = [#tpu.dimension_semantics<parallel>], iteration_bounds = array<i64: 2>, scalar_prefetch = 0 : i64, scratch_operands = 0 : i64, tpu.core_type = #tpu.core_type<tc>, window_params = [{transform_indices = @transform_0, window_bounds = array<i64: 16, 64>}, {transform_indices = @transform_1, window_bounds = array<i64: 16, 16>}, {pipeline_mode = #tpu.pipeline_mode<synchronous>, transform_indices = @transform_2, window_bounds = array<i64: 64, 4>}, {pipeline_mode = #tpu.pipeline_mode<synchronous>, transform_indices = @transform_3, window_bounds = array<i64: 1, 4>}, {pipeline_mode = #tpu.pipeline_mode<synchronous>, transform_indices = @transform_4, window_bounds = array<i64: 1, 4>}, {transform_indices = @transform_5, window_bounds = array<i64: 1, 1>}, {transform_indices = @transform_6, window_bounds = array<i64: 16, 16>}]} {
    %c0 = arith.constant 0 : index
    %c0_0 = arith.constant 0 : index
    %0 = vector.load %arg1[%c0, %c0_0] : memref<16x64xf32, #tpu.memory_space<vmem>>, vector<16x64xf32>
    %c0_1 = arith.constant 0 : index
    %c0_2 = arith.constant 0 : index
    %1 = vector.load %arg3[%c0_1, %c0_2] : memref<64x4xf32, #tpu.memory_space<vmem>>, vector<64x4xf32>
    %cst = arith.constant dense<0.000000e+00> : vector<16x4xf32>
    %2 = tpu.matmul %0, %1, %cst {dimension_numbers = #tpu.dot_dimension_numbers<[1], [0], [0], [1], [0, 0, 1, 1], [], []>} : vector<16x64xf32>, vector<64x4xf32>, vector<16x4xf32> -> vector<16x4xf32>
    %c0_3 = arith.constant 0 : index
    %c0_4 = arith.constant 0 : index
    %3 = vector.load %arg4[%c0_3, %c0_4] : memref<1x4xf32, #tpu.memory_space<vmem>>, vector<1x4xf32>
    %4 = vector.broadcast %3 : vector<1x4xf32> to vector<16x4xf32>
    %5 = arith.addf %2, %4 : vector<16x4xf32>
    %cst_5 = arith.constant 0.000000e+00 : f32
    %6 = vector.broadcast %cst_5 : f32 to vector<16x4xf32>
    %7 = arith.cmpf ogt, %5, %6 : vector<16x4xf32>
    %cst_6 = arith.constant 2.000000e-01 : f32
    %8 = vector.broadcast %cst_6 : f32 to vector<16x4xf32>
    %9 = arith.mulf %8, %5 : vector<16x4xf32>
    %10 = arith.select %7, %5, %9 : vector<16x4xi1>, vector<16x4xf32>
    %c0_7 = arith.constant 0 : index
    %c0_8 = arith.constant 0 : index
    %11 = vector.load %arg5[%c0_7, %c0_8] : memref<1x4xf32, #tpu.memory_space<vmem>>, vector<1x4xf32>
    %12 = vector.broadcast %11 : vector<1x4xf32> to vector<16x4xf32>
    %13 = arith.mulf %10, %12 : vector<16x4xf32>
    %cst_9 = arith.constant dense<0.000000e+00> : vector<16xf32>
    %14 = vector.multi_reduction <add>, %13, %cst_9 [1] : vector<16x4xf32> to vector<16xf32>
    %15 = vector.shape_cast %14 : vector<16xf32> to vector<16x1xf32>
    %c0_10 = arith.constant 0 : index
    %c0_11 = arith.constant 0 : index
    %16 = memref.load %arg6[%c0_10, %c0_11] : memref<1x1xf32, #tpu.memory_space<smem>>
    %17 = vector.broadcast %16 : f32 to vector<16x1xf32>
    %18 = arith.addf %15, %17 : vector<16x1xf32>
    %cst_12 = arith.constant 5.000000e-01 : f32
    %19 = vector.broadcast %cst_12 : f32 to vector<16x1xf32>
    %20 = arith.mulf %19, %18 : vector<16x1xf32>
    %21 = math.tanh %20 : vector<16x1xf32>
    %cst_13 = arith.constant 5.000000e-01 : f32
    %22 = vector.broadcast %cst_13 : f32 to vector<16x1xf32>
    %23 = arith.mulf %22, %21 : vector<16x1xf32>
    %cst_14 = arith.constant 5.000000e-01 : f32
    %24 = vector.broadcast %cst_14 : f32 to vector<16x1xf32>
    %25 = arith.addf %23, %24 : vector<16x1xf32>
    %cst_15 = arith.constant 5.000000e-01 : f32
    %26 = vector.broadcast %cst_15 : f32 to vector<16x1xf32>
    %27 = arith.mulf %25, %26 : vector<16x1xf32>
    %cst_16 = arith.constant 4.000000e-01 : f32
    %28 = vector.broadcast %cst_16 : f32 to vector<16x1xf32>
    %29 = arith.addf %27, %28 : vector<16x1xf32>
    %c0_17 = arith.constant 0 : index
    %c0_18 = arith.constant 0 : index
    %30 = vector.load %arg2[%c0_17, %c0_18] : memref<16x16xf32, #tpu.memory_space<vmem>>, vector<16x16xf32>
    %31 = vector.broadcast %29 : vector<16x1xf32> to vector<16x16xf32>
    %32 = arith.subf %30, %31 : vector<16x16xf32>
    %cst_19 = arith.constant 5.000000e+01 : f32
    %33 = vector.broadcast %cst_19 : f32 to vector<16x16xf32>
    %34 = arith.mulf %33, %32 : vector<16x16xf32>
    %cst_20 = arith.constant 5.000000e-01 : f32
    %35 = vector.broadcast %cst_20 : f32 to vector<16x16xf32>
    %36 = arith.mulf %35, %34 : vector<16x16xf32>
    %37 = math.tanh %36 : vector<16x16xf32>
    %cst_21 = arith.constant 5.000000e-01 : f32
    %38 = vector.broadcast %cst_21 : f32 to vector<16x16xf32>
    %39 = arith.mulf %38, %37 : vector<16x16xf32>
    %cst_22 = arith.constant 5.000000e-01 : f32
    %40 = vector.broadcast %cst_22 : f32 to vector<16x16xf32>
    %41 = arith.addf %39, %40 : vector<16x16xf32>
    %c0_23 = arith.constant 0 : index
    %c0_24 = arith.constant 0 : index
    %42 = vector.load %arg7[%c0_23, %c0_24] : memref<16x16xf32, #tpu.memory_space<vmem>>, vector<16x16xf32>
    tpu.vector_store %arg7[%c0_23, %c0_24], %41 {strides = array<i32>} : memref<16x16xf32, #tpu.memory_space<vmem>>, vector<16x16xf32>,
    %c0_25 = arith.constant 0 : index
    %c0_26 = arith.constant 0 : index
    %43 = vector.load %arg7[%c0_25, %c0_26] : memref<16x16xf32, #tpu.memory_space<vmem>>, vector<16x16xf32>
    %cst_27 = arith.constant dense<0.000000e+00> : vector<16xf32>
    %44 = vector.multi_reduction <add>, %43, %cst_27 [1] : vector<16x16xf32> to vector<16xf32>
    %45 = vector.shape_cast %44 : vector<16xf32> to vector<16x1xf32>
    %cst_28 = arith.constant 9.99999996E-13 : f32
    %46 = vector.broadcast %cst_28 : f32 to vector<16x1xf32>
    %47 = arith.maximumf %45, %46 : vector<16x1xf32>
    %cst_29 = arith.constant 1.000000e+00 : f32
    %48 = vector.broadcast %cst_29 : f32 to vector<16x1xf32>
    %49 = arith.divf %48, %47 : vector<16x1xf32>
    %50 = vector.broadcast %49 : vector<16x1xf32> to vector<16x16xf32>
    %51 = arith.mulf %43, %50 : vector<16x16xf32>
    %c0_30 = arith.constant 0 : index
    %c0_31 = arith.constant 0 : index
    %52 = vector.load %arg7[%c0_30, %c0_31] : memref<16x16xf32, #tpu.memory_space<vmem>>, vector<16x16xf32>
    tpu.vector_store %arg7[%c0_30, %c0_31], %51 {strides = array<i32>} : memref<16x16xf32, #tpu.memory_space<vmem>>, vector<16x16xf32>,
    return
  }
  func.func @transform_0(%arg0: i32) -> (i32, i32) {
    %c0_i32 = arith.constant 0 : i32
    %c0_i32_0 = arith.constant 0 : i32
    return %arg0, %c0_i32 : i32, i32
  }
  func.func @transform_1(%arg0: i32) -> (i32, i32) {
    %c0_i32 = arith.constant 0 : i32
    %c0_i32_0 = arith.constant 0 : i32
    return %arg0, %c0_i32 : i32, i32
  }
  func.func @transform_2(%arg0: i32) -> (i32, i32) {
    %c0_i32 = arith.constant 0 : i32
    %c0_i32_0 = arith.constant 0 : i32
    %c0_i32_1 = arith.constant 0 : i32
    return %c0_i32, %c0_i32_0 : i32, i32
  }
  func.func @transform_3(%arg0: i32) -> (i32, i32) {
    %c0_i32 = arith.constant 0 : i32
    %c0_i32_0 = arith.constant 0 : i32
    %c0_i32_1 = arith.constant 0 : i32
    return %c0_i32, %c0_i32_0 : i32, i32
  }
  func.func @transform_4(%arg0: i32) -> (i32, i32) {
    %c0_i32 = arith.constant 0 : i32
    %c0_i32_0 = arith.constant 0 : i32
    %c0_i32_1 = arith.constant 0 : i32
    return %c0_i32, %c0_i32_0 : i32, i32
  }
  func.func @transform_5(%arg0: i32) -> (i32, i32) {
    %c0_i32 = arith.constant 0 : i32
    %c0_i32_0 = arith.constant 0 : i32
    %c0_i32_1 = arith.constant 0 : i32
    return %c0_i32, %c0_i32_0 : i32, i32
  }
  func.func @transform_6(%arg0: i32) -> (i32, i32) {
    %c0_i32 = arith.constant 0 : i32
    %c0_i32_0 = arith.constant 0 : i32
    return %arg0, %c0_i32 : i32, i32
  }
}

</mosaic_0001>

<llo_original>
// kernel: tpu_custom_call.1
$region0: #{tpu_custom_call.1}
  #allocation0 [shape = 'u32[]', space=smem, size = 0x4, offset = 0x4, fixed_abs, tag = 'smem constant byte address 0x4 - core index']
  #allocation1 [shape = 'u32[72,128]{1,0:T(1,128)}', space=vmem, size = 0x9000, scoped, tag = 'internal scratch']
  #allocation2 [shape = 'f32[1,1]{1,0:T(1,128)S(6)}', space=smem, size = 0x200, scoped, tag = 'scoped memory for tpu_custom_call.1']
  %s0 = inlined_call_operand.vmem [shape: f32[32,64], index: 0, kind: input, shape index: {}]
  %s1 = inlined_call_operand.vmem [shape: f32[32,16], index: 1, kind: input, shape index: {}]
  %s2 = inlined_call_operand.vmem [shape: f32[64,4], index: 2, kind: input, shape index: {}]
  %s3 = inlined_call_operand.vmem [shape: f32[1,4], index: 3, kind: input, shape index: {}]
  %s4 = inlined_call_operand.vmem [shape: f32[1,4], index: 4, kind: input, shape index: {}]
  %s5 = inlined_call_operand.<no memory space> [shape: f32[1,1], index: 5, kind: input, shape index: {}]
  %s6 = inlined_call_operand.vmem [shape: f32[32,16], index: 6, kind: output, shape index: {}]
  %s7 = sld [smem:[#allocation0]]
  $region57: #{tpu_custom_call.1} parent=0
    _
  %s9 = ssub.s32 1, %s7
  %s10 = scalar_select 0, %s9, %s7
  %11 = sst [smem:[#allocation2]] %s5
  loop: start=0, step=1, limit=4
  $region2: #{tpu_custom_call.1} parent=0 // loop_pre_header
    _
  $region3: #{tpu_custom_call.1} parent=0 // loop_header
    %s13 = sphi 0, %s17
    %p14 = scmp.ge.s32.totalorder %s13, 4
    %s23 = sphi 0, %s25
    %s26 = sphi 0, %s23
    %s27 = sphi 0, %s26
    %s43 = sphi 0, %s27
    %s49 = sphi 0, %s51
    %s52 = sphi 0, %s49
    %s53 = sphi 0, %s52
    %s69 = sphi 0, %s53
    %s73 = sphi 0, %s73
    %s75 = sphi 0, %s73
    %s76 = sphi 0, %s75
    %s90 = sphi 0, %s76
    %s94 = sphi 0, %s94
    %s96 = sphi 0, %s94
    %s97 = sphi 0, %s96
    %s111 = sphi 0, %s97
    %s115 = sphi 0, %s115
    %s117 = sphi 0, %s115
    %s118 = sphi 0, %s117
    %s132 = sphi 0, %s118
    %s136 = sphi 0, %s136
    %s138 = sphi 0, %s136
    %s139 = sphi 0, %s138
    %s153 = sphi 0, %s139
    %s159 = sphi 0, %s161
    %s162 = sphi 0, %s159
    %s163 = sphi 0, %s162
    %s179 = sphi 0, %s163
  $region4: #{tpu_custom_call.1} parent=0 // loop_header_branch
    %16 = sbr.rel (%p14) target = $region8
  $region5: #{tpu_custom_call.1} parent=0 // loop_body
    %s18 = ssub.s32 %s13, 1
    %s19 = ssub.s32 %s13, 2
    %s20 = sadd.s32 %s13, 1
    %s21 = ssub.s32 %s13, %s20
    %p22 = scmp.eq.s32.totalorder %s21, 0
    %s24 = sadd.s32 %s23, 1
    %s25 = scalar_select %p22, %s23, %s24
    %p28 = pneg %p22
    %p29 = scmp.eq.s32.totalorder %s13, 1
    %p30 = por %p28, %p29
    %p31 = scmp.ne.s32.totalorder %s23, %s26
    %p32 = scmp.eq.s32.totalorder %s13, 0
    %p33 = por %p31, %p32
    %p34 = scmp.ne.s32.totalorder %s23, %s26
    %p35 = scmp.eq.s32.totalorder %s18, 1
    %p36 = por %p34, %p35
    %p37 = scmp.ne.s32.totalorder %s26, %s27
    %p38 = scmp.eq.s32.totalorder %s18, 0
    %p39 = por %p37, %p38
    %p40 = scmp.ne.s32.totalorder %s26, %s27
    %p41 = scmp.eq.s32.totalorder %s19, 1
    %p42 = por %p40, %p41
    %p44 = scmp.ne.s32.totalorder %s27, %s43
    %p45 = scmp.eq.s32.totalorder %s19, 0
    %p46 = por %p44, %p45
    %s47 = ssub.s32 %s13, %s20
    %p48 = scmp.eq.s32.totalorder %s47, 0
    %s50 = sadd.s32 %s49, 1
    %s51 = scalar_select %p48, %s49, %s50
    %p54 = pneg %p48
    %p55 = scmp.eq.s32.totalorder %s13, 1
    %p56 = por %p54, %p55
    %p57 = scmp.ne.s32.totalorder %s49, %s52
    %p58 = scmp.eq.s32.totalorder %s13, 0
    %p59 = por %p57, %p58
    %p60 = scmp.ne.s32.totalorder %s49, %s52
    %p61 = scmp.eq.s32.totalorder %s18, 1
    %p62 = por %p60, %p61
    %p63 = scmp.ne.s32.totalorder %s52, %s53
    %p64 = scmp.eq.s32.totalorder %s18, 0
    %p65 = por %p63, %p64
    %p66 = scmp.ne.s32.totalorder %s52, %s53
    %p67 = scmp.eq.s32.totalorder %s19, 1
    %p68 = por %p66, %p67
    %p70 = scmp.ne.s32.totalorder %s53, %s69
    %p71 = scmp.eq.s32.totalorder %s19, 0
    %p72 = por %p70, %p71
    %s74 = sadd.s32 %s73, 1
    %p77 = scmp.eq.s32.totalorder %s13, 1
    %p78 = scmp.ne.s32.totalorder %s73, %s75
    %p79 = scmp.eq.s32.totalorder %s13, 0
    %p80 = por %p78, %p79
    %p81 = scmp.ne.s32.totalorder %s73, %s75
    %p82 = scmp.eq.s32.totalorder %s18, 1
    %p83 = por %p81, %p82
    %p84 = scmp.ne.s32.totalorder %s75, %s76
    %p85 = scmp.eq.s32.totalorder %s18, 0
    %p86 = por %p84, %p85
    %p87 = scmp.ne.s32.totalorder %s75, %s76
    %p88 = scmp.eq.s32.totalorder %s19, 1
    %p89 = por %p87, %p88
    %p91 = scmp.ne.s32.totalorder %s76, %s90
    %p92 = scmp.eq.s32.totalorder %s19, 0
    %p93 = por %p91, %p92
    %s95 = sadd.s32 %s94, 1
    %p98 = scmp.eq.s32.totalorder %s13, 1
    %p99 = scmp.ne.s32.totalorder %s94, %s96
    %p100 = scmp.eq.s32.totalorder %s13, 0
    %p101 = por %p99, %p100
    %p102 = scmp.ne.s32.totalorder %s94, %s96
    %p103 = scmp.eq.s32.totalorder %s18, 1
    %p104 = por %p102, %p103
    %p105 = scmp.ne.s32.totalorder %s96, %s97
    %p106 = scmp.eq.s32.totalorder %s18, 0
    %p107 = por %p105, %p106
    %p108 = scmp.ne.s32.totalorder %s96, %s97
    %p109 = scmp.eq.s32.totalorder %s19, 1
    %p110 = por %p108, %p109
    %p112 = scmp.ne.s32.totalorder %s97, %s111
    %p113 = scmp.eq.s32.totalorder %s19, 0
    %p114 = por %p112, %p113
    %s116 = sadd.s32 %s115, 1
    %p119 = scmp.eq.s32.totalorder %s13, 1
    %p120 = scmp.ne.s32.totalorder %s115, %s117
    %p121 = scmp.eq.s32.totalorder %s13, 0
    %p122 = por %p120, %p121
    %p123 = scmp.ne.s32.totalorder %s115, %s117
    %p124 = scmp.eq.s32.totalorder %s18, 1
    %p125 = por %p123, %p124
    %p126 = scmp.ne.s32.totalorder %s117, %s118
    %p127 = scmp.eq.s32.totalorder %s18, 0
    %p128 = por %p126, %p127
    %p129 = scmp.ne.s32.totalorder %s117, %s118
    %p130 = scmp.eq.s32.totalorder %s19, 1
    %p131 = por %p129, %p130
    %p133 = scmp.ne.s32.totalorder %s118, %s132
    %p134 = scmp.eq.s32.totalorder %s19, 0
    %p135 = por %p133, %p134
    %s137 = sadd.s32 %s136, 1
    %p140 = scmp.eq.s32.totalorder %s13, 1
    %p141 = scmp.ne.s32.totalorder %s136, %s138
    %p142 = scmp.eq.s32.totalorder %s13, 0
    %p143 = por %p141, %p142
    %p144 = scmp.ne.s32.totalorder %s136, %s138
    %p145 = scmp.eq.s32.totalorder %s18, 1
    %p146 = por %p144, %p145
    %p147 = scmp.ne.s32.totalorder %s138, %s139
    %p148 = scmp.eq.s32.totalorder %s18, 0
    %p149 = por %p147, %p148
    %p150 = scmp.ne.s32.totalorder %s138, %s139
    %p151 = scmp.eq.s32.totalorder %s19, 1
    %p152 = por %p150, %p151
    %p154 = scmp.ne.s32.totalorder %s139, %s153
    %p155 = scmp.eq.s32.totalorder %s19, 0
    %p156 = por %p154, %p155
    %s157 = ssub.s32 %s13, %s20
    %p158 = scmp.eq.s32.totalorder %s157, 0
    %s160 = sadd.s32 %s159, 1
    %s161 = scalar_select %p158, %s159, %s160
    %p164 = pneg %p158
    %p165 = scmp.eq.s32.totalorder %s13, 1
    %p166 = por %p164, %p165
    %p167 = scmp.ne.s32.totalorder %s159, %s162
    %p168 = scmp.eq.s32.totalorder %s13, 0
    %p169 = por %p167, %p168
    %p170 = scmp.ne.s32.totalorder %s159, %s162
    %p171 = scmp.eq.s32.totalorder %s18, 1
    %p172 = por %p170, %p171
    %p173 = scmp.ne.s32.totalorder %s162, %s163
    %p174 = scmp.eq.s32.totalorder %s18, 0
    %p175 = por %p173, %p174
    %p176 = scmp.ne.s32.totalorder %s162, %s163
    %p177 = scmp.eq.s32.totalorder %s19, 1
    %p178 = por %p176, %p177
    %p180 = scmp.ne.s32.totalorder %s163, %s179
    %p181 = scmp.eq.s32.totalorder %s19, 0
    %p182 = por %p180, %p181
    %p183 = scmp.le.s32.totalorder 1, %s13
    %p184 = scmp.lt.s32.totalorder %s13, 3
    %p185 = pnand %p183, %p184
    %p186 = pneg %p185
    // Predicated region
    $region9: #{tpu_custom_call.1} parent=5 // pred_check
      _
    $region10: #{tpu_custom_call.1} parent=5 // pred_check_branch
      %188 = sbr.rel (%p185) target = $region12
    $region11: #{tpu_custom_call.1} parent=5 // pred_region
      %s189 = ssub.s32 %s13, 1
      // Predicated region
      $region13: #{tpu_custom_call.1} parent=11 // pred_check
        %p190 = pneg %p86
      $region14: #{tpu_custom_call.1} parent=11 // pred_check_branch
        %192 = sbr.rel (%p190) target = $region16
      $region15: #{tpu_custom_call.1} parent=11 // pred_region
        _
      $region16: #{tpu_custom_call.1} parent=11 // pred_fallthru
        _
      // Predicated region
      $region17: #{tpu_custom_call.1} parent=11 // pred_check
        %p193 = pneg %p107
      $region18: #{tpu_custom_call.1} parent=11 // pred_check_branch
        %195 = sbr.rel (%p193) target = $region20
      $region19: #{tpu_custom_call.1} parent=11 // pred_region
        _
      $region20: #{tpu_custom_call.1} parent=11 // pred_fallthru
        _
      // Predicated region
      $region21: #{tpu_custom_call.1} parent=11 // pred_check
        %p196 = pneg %p128
      $region22: #{tpu_custom_call.1} parent=11 // pred_check_branch
        %198 = sbr.rel (%p196) target = $region24
      $region23: #{tpu_custom_call.1} parent=11 // pred_region
        _
      $region24: #{tpu_custom_call.1} parent=11 // pred_fallthru
        _
      // Predicated region
      $region25: #{tpu_custom_call.1} parent=11 // pred_check
        %p199 = pneg %p149
      $region26: #{tpu_custom_call.1} parent=11 // pred_check_branch
        %201 = sbr.rel (%p199) target = $region28
      $region27: #{tpu_custom_call.1} parent=11 // pred_region
        _
      $region28: #{tpu_custom_call.1} parent=11 // pred_fallthru
        _
    $region12: #{tpu_custom_call.1} parent=5 // pred_fallthru
      _
    %p202 = scmp.lt.s32.totalorder %s13, 2
    // Predicated region
    $region29: #{tpu_custom_call.1} parent=5 // pred_check
      %p203 = pneg %p202
    $region30: #{tpu_custom_call.1} parent=5 // pred_check_branch
      %205 = sbr.rel (%p203) target = $region32
    $region31: #{tpu_custom_call.1} parent=5 // pred_region
      // Predicated region
      $region33: #{tpu_custom_call.1} parent=31 // pred_check
        %p206 = pneg %p33
      $region34: #{tpu_custom_call.1} parent=31 // pred_check_branch
        %208 = sbr.rel (%p206) target = $region36
      $region35: #{tpu_custom_call.1} parent=31 // pred_region
        %s209 = smul.u32 2, %s13
        %p210 = scmp.lt.s32.totalorder %s209, 3
        %s211 = scalar_select %p210, %s209, 3
        %s212 = smul.addr %s211, 8
        %s213 = scalar_lea.vmem %s0, %s212
        %s214 = smul.u32 2, %s13
      $region36: #{tpu_custom_call.1} parent=31 // pred_fallthru
        _
      // Predicated region
      $region37: #{tpu_custom_call.1} parent=31 // pred_check
        %p215 = pneg %p59
      $region38: #{tpu_custom_call.1} parent=31 // pred_check_branch
        %217 = sbr.rel (%p215) target = $region40
      $region39: #{tpu_custom_call.1} parent=31 // pred_region
        %s218 = smul.u32 2, %s13
        %p219 = scmp.lt.s32.totalorder %s218, 3
        %s220 = scalar_select %p219, %s218, 3
        %s221 = smul.addr %s220, 8
        %s222 = scalar_lea.vmem %s1, %s221
        %s223 = smul.u32 2, %s13
      $region40: #{tpu_custom_call.1} parent=31 // pred_fallthru
        _
    $region32: #{tpu_custom_call.1} parent=5 // pred_fallthru
      _
    %p224 = scmp.le.s32.totalorder 1, %s13
    %p225 = scmp.lt.s32.totalorder %s13, 3
    %p226 = pnand %p224, %p225
    %p227 = pneg %p226
    // Predicated region
    $region41: #{tpu_custom_call.1} parent=5 // pred_check
      _
    $region42: #{tpu_custom_call.1} parent=5 // pred_check_branch
      %229 = sbr.rel (%p226) target = $region44
    $region43: #{tpu_custom_call.1} parent=5 // pred_region
      %s230 = ssub.s32 %s13, 1
      %s231 = smul.u32 2, %s18
      %p232 = scmp.lt.s32.totalorder %s231, 3
      %s233 = scalar_select %p232, %s231, 3
      %s234 = smul.addr %s233, 8
      %s235 = scalar_lea.vmem %s0, %s234
      %p236 = pneg %p39
      %p237 = pneg %p36
      %s238 = smul.u32 2, %s18
      %p239 = scmp.lt.s32.totalorder %s238, 3
      %s240 = scalar_select %p239, %s238, 3
      %s241 = smul.addr %s240, 8
      %s242 = scalar_lea.vmem %s1, %s241
      %p243 = pneg %p65
      %p244 = pneg %p62
      %p245 = pneg %p86
      %p246 = pneg %p83
      %p247 = pneg %p107
      %p248 = pneg %p104
      %p249 = pneg %p128
      %p250 = pneg %p125
      %p251 = pneg %p149
      %p252 = pneg %p146
      %p253 = pneg %p175
      %p254 = pneg %p172
      %s255 = smul.u32 2, %s18
      %p256 = scmp.lt.s32.totalorder %s255, 3
      %s257 = scalar_select %p256, %s255, 3
      %s258 = smul.addr %s257, 8
      %s259 = scalar_lea.vmem %s6, %s258
      %s260 = smul.u32 2, %s18
      %p261 = scmp.lt.s32.totalorder %s260, 3
      %s262 = scalar_select %p261, %s260, 3
      %s263 = smul.addr %s262, 8
      %s264 = scalar_lea.vmem %s0, %s263
      %s265 = smul.u32 2, %s18
      %s266 = smul.u32 2, %s18
      %p267 = scmp.lt.s32.totalorder %s266, 3
      %s268 = scalar_select %p267, %s266, 3
      %s269 = smul.addr %s268, 8
      %s270 = scalar_lea.vmem %s1, %s269
      %s271 = smul.u32 2, %s18
      %s272 = smul.u32 2, %s18
      %p273 = scmp.lt.s32.totalorder %s272, 3
      %s274 = scalar_select %p273, %s272, 3
      %s275 = smul.addr %s274, 8
      %s276 = scalar_lea.vmem %s6, %s275
      %s277 = smul.u32 2, %s18
      %v278 = vld [vmem:[%s264] sm:$0xff]
      %v279 = vld [vmem:[%s264 + $0x8] sm:$0xff]
      %v280 = vld [vmem:[%s2] sm:$0xff]
      %v281 = vld [vmem:[%s2 + $0x8] sm:$0xff]
      %v282 = vld [vmem:[%s2 + $0x10] sm:$0xff]
      %v283 = vld [vmem:[%s2 + $0x18] sm:$0xff]
      %v284 = vld [vmem:[%s2 + $0x20] sm:$0xff]
      %v285 = vld [vmem:[%s2 + $0x28] sm:$0xff]
      %v286 = vld [vmem:[%s2 + $0x30] sm:$0xff]
      %v287 = vld [vmem:[%s2 + $0x38] sm:$0xff]
      %v288 = vld [vmem:[%s3] sm:$0x1]
      %v290 = vperm.slane %v288, 0
      %vm292 = vcmask 523264
      %v294 = vsel %vm292, %v278, 0
      %v297 = vsel %vm292, %v279, 0
      %299 = vmatpush.msra.mxu0 0.0
      %300 = vmatpush.msra.mxu0 0.0
      %301 = vmatpush.msra.mxu0 0.0
      %302 = vmatpush.msra.mxu0 0.0
      %303 = vmatpush.msra.mxu0 0.0
      %304 = vmatpush.msra.mxu0 0.0
      %305 = vmatpush.msra.mxu0 0.0
      %306 = vmatpush.msra.mxu0 0.0
      %307 = vmatpush.msra.mxu0 %v287
      %308 = vmatpush.msra.mxu0 %v286
      %309 = vmatpush.msra.mxu0 %v285
      %310 = vmatpush.msra.mxu0 %v284
      %311 = vmatpush.msra.mxu0 %v283
      %312 = vmatpush.msra.mxu0 %v282
      %313 = vmatpush.msra.mxu0 %v281
      %314 = vmatpush.msra.mxu0 %v280
      %315 = vmatmul.f32.gmra.mxu0 %v294
      %v316 = vpop.f32.mrf.mxu0
      %v317 = vadd.f32 %v290, %v316
      %318 = vmatmul.f32.gmra.mxu0 %v297
      %v319 = vpop.f32.mrf.mxu0
      %v320 = vadd.f32 %v290, %v319
      %321 = vdwg.mxu0
      %vm322 = vcmp.gt.f32.partialorder %v317, 0.0
      %vm323 = vcmp.gt.f32.partialorder %v320, 0.0
      %v324 = vmul.f32 %v317, 0.2
      %v325 = vmul.f32 %v320, 0.2
      %v326 = vsel %vm322, %v317, %v324
      %v327 = vsel %vm323, %v320, %v325
      %v328 = vld [vmem:[%s4] sm:$0x1]
      %v330 = vperm.slane %v328, 0
      %v332 = vmul.f32 %v326, %v330
      %v333 = vmul.f32 %v327, %v330
      %vm334 = vcmask 31744
      %v335 = vsel %vm334, %v332, 0.0
      %336 = vadd.xlane.f32.xlu0 %v335
      %v337 = vpop.xlane.xlu0 %336
      %v338 = vsel %vm334, %v333, 0.0
      %339 = vadd.xlane.f32.xlu0 %v338
      %v340 = vpop.xlane.xlu0 %339
      %s341 = sld [smem:[#allocation2]]
      %v342 = vstv %s341
      %v343 = vadd.f32 %v337, %v342
      %v344 = vadd.f32 %v340, %v342
      %v345 = vmul.f32 %v343, 0.5
      %v346 = vmul.f32 %v344, 0.5
      %v347 = vtanh.pop %v345
      %v348 = vtanh.pop %v346
      %v349 = vmul.f32 %v347, 0.5
      %v350 = vmul.f32 %v348, 0.5
      %v351 = vadd.f32 %v349, 0.5
      %v352 = vadd.f32 %v350, 0.5
      %v353 = vmul.f32 %v351, 0.5
      %v354 = vmul.f32 %v352, 0.5
      %v355 = vadd.f32 %v353, 0.4
      %v356 = vadd.f32 %v354, 0.4
      %v357 = vld [vmem:[%s270] sm:$0xff]
      %v358 = vld [vmem:[%s270 + $0x8] sm:$0xff]
      %v359 = vsub.f32 %v357, %v355
      %v360 = vsub.f32 %v358, %v356
      %v361 = vmul.f32 %v359, 50.0
      %v362 = vmul.f32 %v360, 50.0
      %v363 = vmul.f32 %v361, 0.5
      %v364 = vmul.f32 %v362, 0.5
      %v365 = vtanh.pop %v363
      %v366 = vtanh.pop %v364
      %v367 = vmul.f32 %v365, 0.5
      %v368 = vmul.f32 %v366, 0.5
      %v369 = vadd.f32 %v367, 0.5
      %v370 = vadd.f32 %v368, 0.5
      %vm371 = vcmask 130048
      %372 = vst.msk [vmem:[%s276] sm:$0xff] %vm371, %v369
      %373 = vst.msk [vmem:[%s276 + $0x8] sm:$0xff] %vm371, %v370
      %v374 = vld [vmem:[%s276] sm:$0xff]
      %v375 = vld [vmem:[%s276 + $0x8] sm:$0xff]
      %v376 = vsel %vm371, %v374, 0.0
      %377 = vadd.xlane.f32.xlu0 %v376
      %v378 = vpop.xlane.xlu0 %377
      %v379 = vsel %vm371, %v375, 0.0
      %380 = vadd.xlane.f32.xlu0 %v379
      %v381 = vpop.xlane.xlu0 %380
      %v382 = vmax.f32 %v378, 1e-12
      %v383 = vmax.f32 %v381, 1e-12
      %v384 = vrcp.pop %v382
      %v385 = vmul.f32 %v382, %v384
      %v386 = vsub.f32 1.0, %v385
      %v387 = vmul.f32 %v384, %v386
      %v388 = vadd.f32 %v384, %v387
      %vm389 = vweird.f32 %v382
      %vm390 = vweird.f32 %v384
      %vm391 = vmor %vm389, %vm390
      %v392 = vsel %vm391, %v384, %v388
      %v393 = vand.u32 2147483647, %v382
      %vm394 = vcmp.eq.f32.partialorder %v393, 8.507059e+37
      %v395 = vand.u32 %v382, 2147483648
      %v396 = vor.u32 1.1754944e-38, %v395
      %v397 = vsel %vm394, %v396, %v392
      %v398 = vmul.f32 1.0, %v397
      %v399 = vrcp.pop %v383
      %v400 = vmul.f32 %v383, %v399
      %v401 = vsub.f32 1.0, %v400
      %v402 = vmul.f32 %v399, %v401
      %v403 = vadd.f32 %v399, %v402
      %vm404 = vweird.f32 %v383
      %vm405 = vweird.f32 %v399
      %vm406 = vmor %vm404, %vm405
      %v407 = vsel %vm406, %v399, %v403
      %v408 = vand.u32 2147483647, %v383
      %vm409 = vcmp.eq.f32.partialorder %v408, 8.507059e+37
      %v410 = vand.u32 %v383, 2147483648
      %v411 = vor.u32 1.1754944e-38, %v410
      %v412 = vsel %vm409, %v411, %v407
      %v413 = vmul.f32 1.0, %v412
      %v414 = vmul.f32 %v374, %v398
      %v415 = vmul.f32 %v375, %v413
      %416 = vst.msk [vmem:[%s276] sm:$0xff] %vm371, %v414
      %417 = vst.msk [vmem:[%s276 + $0x8] sm:$0xff] %vm371, %v415
      %s418 = smul.u32 2, %s18
      %p419 = scmp.lt.s32.totalorder %s418, 3
      %s420 = scalar_select %p419, %s418, 3
      %s421 = smul.addr %s420, 8
      %s422 = scalar_lea.vmem %s6, %s421
      // Predicated region
      $region45: #{tpu_custom_call.1} parent=43 // pred_check
        %p423 = pneg %p172
      $region46: #{tpu_custom_call.1} parent=43 // pred_check_branch
        %425 = sbr.rel (%p423) target = $region48
      $region47: #{tpu_custom_call.1} parent=43 // pred_region
        %s426 = smul.u32 2, %s18
      $region48: #{tpu_custom_call.1} parent=43 // pred_fallthru
        _
    $region44: #{tpu_custom_call.1} parent=5 // pred_fallthru
      _
    %p427 = scmp.le.s32.totalorder 2, %s13
    // Predicated region
    $region49: #{tpu_custom_call.1} parent=5 // pred_check
      %p428 = pneg %p427
    $region50: #{tpu_custom_call.1} parent=5 // pred_check_branch
      %430 = sbr.rel (%p428) target = $region52
    $region51: #{tpu_custom_call.1} parent=5 // pred_region
      %s431 = ssub.s32 %s13, 2
      // Predicated region
      $region53: #{tpu_custom_call.1} parent=51 // pred_check
        %p432 = pneg %p178
      $region54: #{tpu_custom_call.1} parent=51 // pred_check_branch
        %434 = sbr.rel (%p432) target = $region56
      $region55: #{tpu_custom_call.1} parent=51 // pred_region
        %s435 = smul.u32 2, %s19
        %p436 = scmp.lt.s32.totalorder %s435, 3
        %s437 = scalar_select %p436, %s435, 3
        %s438 = smul.addr %s437, 8
        %s439 = scalar_lea.vmem %s6, %s438
      $region56: #{tpu_custom_call.1} parent=51 // pred_fallthru
        _
    $region52: #{tpu_custom_call.1} parent=5 // pred_fallthru
      _
  $region6: #{tpu_custom_call.1} parent=0 // loop_footer
    %s17 = sadd.s32 1, %s13
  $region7: #{tpu_custom_call.1} parent=0 // loop_footer_branch
    %12 = sbr.rel target = $region3
  $region8: #{tpu_custom_call.1} parent=0 // loop_exit
    _

</llo_original>
